<compile_context>
chip_gen: v7x
topology: tpu7x:2x2x1
jax: 0.10.0
libtpu: 0.0.40
codegen_flags: <defaults>
</compile_context>

<pallas_src>
import jax
import jax.numpy as jnp
from jax.experimental import pallas as pl
from jax.experimental.pallas import tpu as pltpu


def _make_ce_acc_kernel(C, chunk):
    """Build the row-tile kernel for `C` classes processed in `chunk`-wide slabs."""
    n_chunks = -(-C // chunk)

    def kernel(logits_ref, label_ref, out_ref):
        labels = label_ref[...]                       # (TN, 1) int32
        tn = logits_ref.shape[0]

        # Online carries (all (TN, 1)).
        m = jnp.full((tn, 1), -jnp.inf, jnp.float32)  # running row max (f32)
        s = jnp.zeros((tn, 1), jnp.float32)           # running sum exp(x - m)
        tgt = jnp.zeros((tn, 1), jnp.float32)         # target logit (picked out once)
        bm = jnp.full((tn, 1), -jnp.inf, jnp.float32) # best value for argmax
        bi = jnp.full((tn, 1), C, jnp.int32)          # best (first) argmax index

        # Static Python loop: chunk starts/widths are compile-time constants, so
        # every slice of logits_ref is a static, lane-aligned load.
        for ci in range(n_chunks):
            c0 = ci * chunk
            w = min(chunk, C - c0)
            x = logits_ref[:, c0:c0 + w]              # native dtype, (TN, w)

            # One iota per chunk, reused for both the one-hot gather and argmax.
            col = jax.lax.broadcasted_iota(jnp.int32, (tn, w), 1) + c0

            # --- comparisons / argmax in native dtype (exact; 2x VALU on bf16) ---
            cmax = jnp.max(x, axis=-1, keepdims=True)             # (TN, 1) native
            is_max = x == cmax                                    # exact compare
            cidx = jnp.min(jnp.where(is_max, col, C), axis=-1, keepdims=True)
            cmax32 = cmax.astype(jnp.float32)
            better = cmax32 > bm            # strict > keeps the FIRST max (torch/jnp)
            bm = jnp.where(better, cmax32, bm)
            bi = jnp.where(better, cidx, bi)

            # --- log-sum-exp / target gather in f32 (accuracy-critical path) ---
            xf = x.astype(jnp.float32)
            m_new = jnp.maximum(m, cmax32)
            s = s * jnp.exp(m - m_new) + jnp.sum(
                jnp.exp(xf - m_new), axis=-1, keepdims=True)
            m = m_new
            onehot = col == labels
            tgt = tgt + jnp.sum(jnp.where(onehot, xf, 0.0), axis=-1, keepdims=True)

        lse = jnp.log(s) + m                          # (TN, 1)

        # NOTE: garbage rows of a partial boundary tile carry label == -100, so
        # any NaN/Inf they produce is killed HERE, before the cross-row sum.
        # Do not reorder this mask after the reductions.
        valid = labels != -100
        loss_rows = jnp.where(valid, lse - tgt, 0.0)
        # torch acc counts pred == label with no ignore mask; -100 never matches.
        correct = (bi == labels).astype(jnp.float32)

        loss_s = jnp.sum(loss_rows)
        # Counts are exact in f32 per block (<= tn <= 4096); host-side sum is
        # exact up to ~2^24 total rows.
        valid_s = jnp.sum(valid.astype(jnp.float32))
        correct_s = jnp.sum(correct)

        # Per-block partials in a lane-dense (1, 8, 128) tile:
        # sublane 0, lanes 0..2 = [loss_sum, valid_count, correct_count].
        sub = jax.lax.broadcasted_iota(jnp.int32, out_ref.shape, 1)
        lane = jax.lax.broadcasted_iota(jnp.int32, out_ref.shape, 2)
        on_sub0 = sub == 0
        out_ref[...] = (
            jnp.where(on_sub0 & (lane == 0), loss_s, 0.0)
            + jnp.where(on_sub0 & (lane == 1), valid_s, 0.0)
            + jnp.where(on_sub0 & (lane == 2), correct_s, 0.0)
        )

    return kernel


def cross_entropy_acc(logits, label, *, tn=None, chunk=None, vmem_limit_bytes=None):
    """Returns (acc, loss) matching CrossEntropy_acc.forward(logits, label)."""
    N, C = logits.shape
    itemsize = jnp.dtype(logits.dtype).itemsize

    # ---- generation-aware defaults (v7x: 64 MiB VMEM/TC; v5e/v6e: 128 MiB) ----
    vmem_cap = 128 * 1024 * 1024
    try:
        vmem_cap = int(pltpu.get_tpu_info().vmem_capacity_bytes)
    except Exception:
        pass
    small_vmem = vmem_cap < 96 * 1024 * 1024          # v7x-class part
    if vmem_limit_bytes is None:
        vmem_limit_bytes = (36 if small_vmem else 48) * 1024 * 1024
    target_block_bytes = (2 if small_vmem else 4) * 1024 * 1024

    # ---- class-chunk size (static; bounds all (TN, C) temporaries) ----
    if chunk is None:
        if C <= 2048:
            chunk = C                                  # single pass
        else:
            chunk = max(1024, -(-C // 32))             # <= ~32 unrolled chunks
            chunk = -(-chunk // 128) * 128             # lane-aligned
    chunk = max(1, min(int(chunk), C))

    # ---- adaptive row tile ----
    if tn is None:
        rows = max(8, (target_block_bytes // max(1, C * itemsize)) // 8 * 8)
        # Keep >= 2 row blocks when possible so both v7x TensorCores get work.
        half = max(8, ((-(-N // 2)) + 7) // 8 * 8)
        tn = int(min(rows, half, 4096))
    tn = max(8, (int(tn) // 8) * 8)

    n_blocks = pl.cdiv(N, tn)

    # Only the tiny label vector gets padded (-100 == ignore_index), which also
    # masks any out-of-range rows of a partial logits tile.
    n_pad = n_blocks * tn - N
    label_p = jnp.pad(label.astype(jnp.int32), (0, n_pad), constant_values=-100)
    label2 = label_p.reshape(-1, 1)

    kernel = _make_ce_acc_kernel(C, chunk)

    partials = pl.pallas_call(
        kernel,
        out_shape=jax.ShapeDtypeStruct((n_blocks, 8, 128), jnp.float32),
        grid_spec=pltpu.PrefetchScalarGridSpec(
            num_scalar_prefetch=0,
            grid=(n_blocks,),
            in_specs=[
                pl.BlockSpec((tn, C), lambda i: (i, 0)),   # logits, native dtype
                pl.BlockSpec((tn, 1), lambda i: (i, 0)),   # labels (int32 column)
            ],
            out_specs=pl.BlockSpec((1, 8, 128), lambda i: (i, 0, 0)),
        ),
        compiler_params=pltpu.CompilerParams(
            dimension_semantics=("parallel",),
            vmem_limit_bytes=vmem_limit_bytes,
        ),
    )(logits, label2)

    totals = jnp.sum(partials, axis=(0, 1))            # (128,)
    loss_sum, valid_cnt, correct_cnt = totals[0], totals[1], totals[2]

    # Matches nn.CrossEntropyLoss mean over non-ignored rows (NaN if ALL labels
    # are -100, same as torch) and torch's sum(pred == label) / label.shape[0].
    loss = loss_sum / valid_cnt
    acc = correct_cnt / jnp.float32(N)
    return acc, loss


def _reference(logits, label):
    lf = logits.astype(jnp.float32)
    valid = label != -100
    logp = jax.nn.log_softmax(lf, axis=-1)
    tgt = jnp.take_along_axis(logp, jnp.maximum(label, 0)[:, None], axis=-1)[:, 0]
    ref_loss = -jnp.sum(jnp.where(valid, tgt, 0.0)) / jnp.sum(valid)
    ref_acc = jnp.sum(jnp.argmax(logits, axis=-1) == label) / label.shape[0]
    return ref_acc, ref_loss


if __name__ == "__main__":
    key = jax.random.PRNGKey(0)

    # Test 1: small f32 problem (single class chunk, two row blocks).
    k1, k2, k3, k4 = jax.random.split(key, 4)
    N1, C1 = 16, 128
    logits1 = jax.random.normal(k1, (N1, C1), dtype=jnp.float32)
    label1 = jax.random.randint(k2, (N1,), 0, C1, dtype=jnp.int32)
    label1 = label1.at[3].set(-100)                   # exercise ignore_index path

    acc1, loss1 = cross_entropy_acc(logits1, label1)
    jax.block_until_ready((acc1, loss1))
    ref_acc1, ref_loss1 = _reference(logits1, label1)
    assert jnp.allclose(loss1, ref_loss1, rtol=1e-5, atol=1e-5), (loss1, ref_loss1)
    assert jnp.allclose(acc1, ref_acc1), (acc1, ref_acc1)

    # Test 2: bf16 logits with forced class chunking (online LSE / argmax carries).
    N2, C2 = 32, 512
    logits2 = jax.random.normal(k3, (N2, C2), dtype=jnp.float32).astype(jnp.bfloat16)
    label2 = jax.random.randint(k4, (N2,), 0, C2, dtype=jnp.int32)
    label2 = label2.at[7].set(-100)

    acc2, loss2 = cross_entropy_acc(logits2, label2, chunk=128)
    jax.block_until_ready((acc2, loss2))
    ref_acc2, ref_loss2 = _reference(logits2, label2)
    assert jnp.allclose(loss2, ref_loss2, rtol=1e-4, atol=1e-4), (loss2, ref_loss2)
    assert jnp.allclose(acc2, ref_acc2), (acc2, ref_acc2)

    print("KERNEL_OK")
</pallas_src>

<mosaic_0001>
module attributes {stable_mosaic.version = 11 : i64} {
  func.func @kernel(%arg0: i32, %arg1: memref<8x128xf32, #tpu.memory_space<vmem>>, %arg2: memref<8x1xi32, #tpu.memory_space<vmem>>, %arg3: memref<1x8x128xf32, #tpu.memory_space<vmem>>) attributes {dimension_semantics = [#tpu.dimension_semantics<parallel>], iteration_bounds = array<i64: 2>, scalar_prefetch = 0 : i64, scratch_operands = 0 : i64, tpu.core_type = #tpu.core_type<tc>, window_params = [{transform_indices = @transform_0, window_bounds = array<i64: 8, 128>}, {transform_indices = @transform_1, window_bounds = array<i64: 8, 1>}, {transform_indices = @transform_2, window_bounds = array<i64: 1, 8, 128>}]} {
    %c0 = arith.constant 0 : index
    %c0_0 = arith.constant 0 : index
    %0 = vector.load %arg2[%c0, %c0_0] : memref<8x1xi32, #tpu.memory_space<vmem>>, vector<8x1xi32>
    %cst = arith.constant 0xFF800000 : f32
    %1 = vector.broadcast %cst : f32 to vector<8x1xf32>
    %cst_1 = arith.constant 0.000000e+00 : f32
    %2 = vector.broadcast %cst_1 : f32 to vector<8x1xf32>
    %cst_2 = arith.constant 0.000000e+00 : f32
    %3 = vector.broadcast %cst_2 : f32 to vector<8x1xf32>
    %cst_3 = arith.constant 0xFF800000 : f32
    %4 = vector.broadcast %cst_3 : f32 to vector<8x1xf32>
    %c128_i32 = arith.constant 128 : i32
    %5 = vector.broadcast %c128_i32 : i32 to vector<8x1xi32>
    %c0_4 = arith.constant 0 : index
    %c0_5 = arith.constant 0 : index
    %6 = vector.load %arg1[%c0_4, %c0_5] : memref<8x128xf32, #tpu.memory_space<vmem>>, vector<8x128xf32>
    %7 = tpu.iota {dimensions = array<i32: 1>} : vector<8x128xi32>
    %c0_i32 = arith.constant 0 : i32
    %8 = vector.broadcast %c0_i32 : i32 to vector<8x128xi32>
    %9 = arith.addi %7, %8 : vector<8x128xi32>
    %cst_6 = arith.constant dense<0xFF800000> : vector<8xf32>
    %10 = vector.multi_reduction <maximumf>, %6, %cst_6 [1] : vector<8x128xf32> to vector<8xf32>
    %11 = vector.shape_cast %10 : vector<8xf32> to vector<8x1xf32>
    %12 = vector.broadcast %11 : vector<8x1xf32> to vector<8x128xf32>
    %13 = arith.cmpf oeq, %6, %12 : vector<8x128xf32>
    %c128_i32_7 = arith.constant 128 : i32
    %14 = vector.broadcast %c128_i32_7 : i32 to vector<8x128xi32>
    %15 = arith.select %13, %9, %14 : vector<8x128xi1>, vector<8x128xi32>
    %cst_8 = arith.constant dense<2147483647> : vector<8xi32>
    %16 = vector.multi_reduction <minsi>, %15, %cst_8 [1] : vector<8x128xi32> to vector<8xi32>
    %17 = vector.shape_cast %16 : vector<8xi32> to vector<8x1xi32>
    %18 = arith.cmpf ogt, %11, %4 : vector<8x1xf32>
    %19 = arith.select %18, %17, %5 : vector<8x1xi1>, vector<8x1xi32>
    %20 = arith.maximumf %1, %11 : vector<8x1xf32>
    %21 = arith.subf %1, %20 : vector<8x1xf32>
    %22 = math.exp %21 : vector<8x1xf32>
    %23 = arith.mulf %2, %22 : vector<8x1xf32>
    %24 = vector.broadcast %20 : vector<8x1xf32> to vector<8x128xf32>
    %25 = arith.subf %6, %24 : vector<8x128xf32>
    %26 = math.exp %25 : vector<8x128xf32>
    %cst_9 = arith.constant dense<0.000000e+00> : vector<8xf32>
    %27 = vector.multi_reduction <add>, %26, %cst_9 [1] : vector<8x128xf32> to vector<8xf32>
    %28 = vector.shape_cast %27 : vector<8xf32> to vector<8x1xf32>
    %29 = arith.addf %23, %28 : vector<8x1xf32>
    %30 = vector.broadcast %0 : vector<8x1xi32> to vector<8x128xi32>
    %31 = arith.cmpi eq, %9, %30 : vector<8x128xi32>
    %cst_10 = arith.constant 0.000000e+00 : f32
    %32 = vector.broadcast %cst_10 : f32 to vector<8x128xf32>
    %33 = arith.select %31, %6, %32 : vector<8x128xi1>, vector<8x128xf32>
    %cst_11 = arith.constant dense<0.000000e+00> : vector<8xf32>
    %34 = vector.multi_reduction <add>, %33, %cst_11 [1] : vector<8x128xf32> to vector<8xf32>
    %35 = vector.shape_cast %34 : vector<8xf32> to vector<8x1xf32>
    %36 = arith.addf %3, %35 : vector<8x1xf32>
    %37 = math.log %29 : vector<8x1xf32>
    %38 = arith.addf %37, %20 : vector<8x1xf32>
    %c-100_i32 = arith.constant -100 : i32
    %39 = vector.broadcast %c-100_i32 : i32 to vector<8x1xi32>
    %40 = arith.cmpi ne, %0, %39 : vector<8x1xi32>
    %41 = arith.subf %38, %36 : vector<8x1xf32>
    %cst_12 = arith.constant 0.000000e+00 : f32
    %42 = vector.broadcast %cst_12 : f32 to vector<8x1xf32>
    %43 = arith.select %40, %41, %42 : vector<8x1xi1>, vector<8x1xf32>
    %44 = arith.cmpi eq, %19, %0 : vector<8x1xi32>
    %45 = arith.extui %44 : vector<8x1xi1> to vector<8x1xi32>
    %46 = arith.sitofp %45 : vector<8x1xi32> to vector<8x1xf32>
    %47 = vector.shape_cast %43 : vector<8x1xf32> to vector<1x8x1xf32>
    %cst_13 = arith.constant dense<0.000000e+00> : vector<1xf32>
    %48 = vector.multi_reduction <add>, %47, %cst_13 [1, 2] : vector<1x8x1xf32> to vector<1xf32>
    %49 = vector.shape_cast %48 : vector<1xf32> to vector<1x1x1xf32>
    %50 = vector.extract %49[0, 0, 0] : f32 from vector<1x1x1xf32>
    %51 = arith.extui %40 : vector<8x1xi1> to vector<8x1xi32>
    %52 = arith.sitofp %51 : vector<8x1xi32> to vector<8x1xf32>
    %53 = vector.shape_cast %52 : vector<8x1xf32> to vector<1x8x1xf32>
    %cst_14 = arith.constant dense<0.000000e+00> : vector<1xf32>
    %54 = vector.multi_reduction <add>, %53, %cst_14 [1, 2] : vector<1x8x1xf32> to vector<1xf32>
    %55 = vector.shape_cast %54 : vector<1xf32> to vector<1x1x1xf32>
    %56 = vector.extract %55[0, 0, 0] : f32 from vector<1x1x1xf32>
    %57 = vector.shape_cast %46 : vector<8x1xf32> to vector<1x8x1xf32>
    %cst_15 = arith.constant dense<0.000000e+00> : vector<1xf32>
    %58 = vector.multi_reduction <add>, %57, %cst_15 [1, 2] : vector<1x8x1xf32> to vector<1xf32>
    %59 = vector.shape_cast %58 : vector<1xf32> to vector<1x1x1xf32>
    %60 = vector.extract %59[0, 0, 0] : f32 from vector<1x1x1xf32>
    %61 = tpu.iota {dimensions = array<i32: 1>} : vector<1x8x128xi32>
    %62 = tpu.iota {dimensions = array<i32: 2>} : vector<1x8x128xi32>
    %c0_i32_16 = arith.constant 0 : i32
    %63 = vector.broadcast %c0_i32_16 : i32 to vector<1x8x128xi32>
    %64 = arith.cmpi eq, %61, %63 : vector<1x8x128xi32>
    %c0_i32_17 = arith.constant 0 : i32
    %65 = vector.broadcast %c0_i32_17 : i32 to vector<1x8x128xi32>
    %66 = arith.cmpi eq, %62, %65 : vector<1x8x128xi32>
    %67 = arith.andi %64, %66 : vector<1x8x128xi1>
    %cst_18 = arith.constant 0.000000e+00 : f32
    %68 = vector.broadcast %50 : f32 to vector<1x8x128xf32>
    %69 = vector.broadcast %cst_18 : f32 to vector<1x8x128xf32>
    %70 = arith.select %67, %68, %69 : vector<1x8x128xi1>, vector<1x8x128xf32>
    %c1_i32 = arith.constant 1 : i32
    %71 = vector.broadcast %c1_i32 : i32 to vector<1x8x128xi32>
    %72 = arith.cmpi eq, %62, %71 : vector<1x8x128xi32>
    %73 = arith.andi %64, %72 : vector<1x8x128xi1>
    %cst_19 = arith.constant 0.000000e+00 : f32
    %74 = vector.broadcast %56 : f32 to vector<1x8x128xf32>
    %75 = vector.broadcast %cst_19 : f32 to vector<1x8x128xf32>
    %76 = arith.select %73, %74, %75 : vector<1x8x128xi1>, vector<1x8x128xf32>
    %77 = arith.addf %70, %76 : vector<1x8x128xf32>
    %c2_i32 = arith.constant 2 : i32
    %78 = vector.broadcast %c2_i32 : i32 to vector<1x8x128xi32>
    %79 = arith.cmpi eq, %62, %78 : vector<1x8x128xi32>
    %80 = arith.andi %64, %79 : vector<1x8x128xi1>
    %cst_20 = arith.constant 0.000000e+00 : f32
    %81 = vector.broadcast %60 : f32 to vector<1x8x128xf32>
    %82 = vector.broadcast %cst_20 : f32 to vector<1x8x128xf32>
    %83 = arith.select %80, %81, %82 : vector<1x8x128xi1>, vector<1x8x128xf32>
    %84 = arith.addf %77, %83 : vector<1x8x128xf32>
    %c0_21 = arith.constant 0 : index
    %c0_22 = arith.constant 0 : index
    %c0_23 = arith.constant 0 : index
    %85 = vector.load %arg3[%c0_21, %c0_22, %c0_23] : memref<1x8x128xf32, #tpu.memory_space<vmem>>, vector<1x8x128xf32>
    tpu.vector_store %arg3[%c0_21, %c0_22, %c0_23], %84 {strides = array<i32>} : memref<1x8x128xf32, #tpu.memory_space<vmem>>, vector<1x8x128xf32>,
    return
  }
  func.func @transform_0(%arg0: i32) -> (i32, i32) {
    %c0_i32 = arith.constant 0 : i32
    %c0_i32_0 = arith.constant 0 : i32
    return %arg0, %c0_i32 : i32, i32
  }
  func.func @transform_1(%arg0: i32) -> (i32, i32) {
    %c0_i32 = arith.constant 0 : i32
    %c0_i32_0 = arith.constant 0 : i32
    return %arg0, %c0_i32 : i32, i32
  }
  func.func @transform_2(%arg0: i32) -> (i32, i32, i32) {
    %c0_i32 = arith.constant 0 : i32
    %c0_i32_0 = arith.constant 0 : i32
    %c0_i32_1 = arith.constant 0 : i32
    return %arg0, %c0_i32, %c0_i32_0 : i32, i32, i32
  }
}

</mosaic_0001>

<llo_original>
// kernel: tpu_custom_call.1
$region0: #{tpu_custom_call.1}
  #allocation0 [shape = 'u32[]', space=smem, size = 0x4, offset = 0x4, fixed_abs, tag = 'smem constant byte address 0x4 - core index']
  #allocation1 [shape = 'u32[144,128]{1,0:T(1,128)}', space=vmem, size = 0x12000, scoped, tag = 'internal scratch']
  %s0 = inlined_call_operand.vmem [shape: f32[16,128], index: 0, kind: input, shape index: {}]
  %s1 = inlined_call_operand.vmem [shape: s32[16,1], index: 1, kind: input, shape index: {}]
  %s2 = inlined_call_operand.hbm [shape: f32[2,8,128], index: 2, kind: output, shape index: {}]
  %s3 = sld [smem:[#allocation0]]
  $region41: #{tpu_custom_call.1} parent=0
    _
  %s5 = ssub.s32 1, %s3
  %s6 = scalar_select 0, %s5, %s3
  $region1: #{tpu_custom_call.1} parent=0
    #allocation2 [shape = 'u8[8192]{0}', space=vmem, size = 0x2000, scoped, tag = 'output window, operand 0']
    #allocation3 [shape = 's32[2]{0}', space=sflag, size = 0x8, scoped, tag = 'scoped memory for tpu_custom_call.1']
    %7 = vsyncpa [#allocation3], 0
    %s8 = scalar_lea.sflag [#allocation3], 1
    %9 = vsyncpa %s8, 0
    loop: start=0, step=1, limit=4
    $region2: #{tpu_custom_call.1} parent=1 // loop_pre_header
      _
    $region3: #{tpu_custom_call.1} parent=1 // loop_header
      %s11 = sphi 0, %s15
      %p12 = scmp.ge.s32.totalorder %s11, 4
      %s21 = sphi 0, %s23
      %s24 = sphi 0, %s21
      %s25 = sphi 0, %s24
      %s41 = sphi 0, %s25
      %s47 = sphi 0, %s49
      %s50 = sphi 0, %s47
      %s51 = sphi 0, %s50
      %s67 = sphi 0, %s51
      %s73 = sphi 0, %s75
      %s76 = sphi 0, %s73
      %s77 = sphi 0, %s76
      %s93 = sphi 0, %s77
    $region4: #{tpu_custom_call.1} parent=1 // loop_header_branch
      %14 = sbr.rel (%p12) target = $region8
    $region5: #{tpu_custom_call.1} parent=1 // loop_body
      %s16 = ssub.s32 %s11, 1
      %s17 = ssub.s32 %s11, 2
      %s18 = sadd.s32 %s11, 1
      %s19 = ssub.s32 %s11, %s18
      %p20 = scmp.eq.s32.totalorder %s19, 0
      %s22 = sadd.s32 %s21, 1
      %s23 = scalar_select %p20, %s21, %s22
      %p26 = pneg %p20
      %p27 = scmp.eq.s32.totalorder %s11, 1
      %p28 = por %p26, %p27
      %p29 = scmp.ne.s32.totalorder %s21, %s24
      %p30 = scmp.eq.s32.totalorder %s11, 0
      %p31 = por %p29, %p30
      %p32 = scmp.ne.s32.totalorder %s21, %s24
      %p33 = scmp.eq.s32.totalorder %s16, 1
      %p34 = por %p32, %p33
      %p35 = scmp.ne.s32.totalorder %s24, %s25
      %p36 = scmp.eq.s32.totalorder %s16, 0
      %p37 = por %p35, %p36
      %p38 = scmp.ne.s32.totalorder %s24, %s25
      %p39 = scmp.eq.s32.totalorder %s17, 1
      %p40 = por %p38, %p39
      %p42 = scmp.ne.s32.totalorder %s25, %s41
      %p43 = scmp.eq.s32.totalorder %s17, 0
      %p44 = por %p42, %p43
      %s45 = ssub.s32 %s11, %s18
      %p46 = scmp.eq.s32.totalorder %s45, 0
      %s48 = sadd.s32 %s47, 1
      %s49 = scalar_select %p46, %s47, %s48
      %p52 = pneg %p46
      %p53 = scmp.eq.s32.totalorder %s11, 1
      %p54 = por %p52, %p53
      %p55 = scmp.ne.s32.totalorder %s47, %s50
      %p56 = scmp.eq.s32.totalorder %s11, 0
      %p57 = por %p55, %p56
      %p58 = scmp.ne.s32.totalorder %s47, %s50
      %p59 = scmp.eq.s32.totalorder %s16, 1
      %p60 = por %p58, %p59
      %p61 = scmp.ne.s32.totalorder %s50, %s51
      %p62 = scmp.eq.s32.totalorder %s16, 0
      %p63 = por %p61, %p62
      %p64 = scmp.ne.s32.totalorder %s50, %s51
      %p65 = scmp.eq.s32.totalorder %s17, 1
      %p66 = por %p64, %p65
      %p68 = scmp.ne.s32.totalorder %s51, %s67
      %p69 = scmp.eq.s32.totalorder %s17, 0
      %p70 = por %p68, %p69
      %s71 = ssub.s32 %s11, %s18
      %p72 = scmp.eq.s32.totalorder %s71, 0
      %s74 = sadd.s32 %s73, 1
      %s75 = scalar_select %p72, %s73, %s74
      %p78 = pneg %p72
      %p79 = scmp.eq.s32.totalorder %s11, 1
      %p80 = por %p78, %p79
      %p81 = scmp.ne.s32.totalorder %s73, %s76
      %p82 = scmp.eq.s32.totalorder %s11, 0
      %p83 = por %p81, %p82
      %p84 = scmp.ne.s32.totalorder %s73, %s76
      %p85 = scmp.eq.s32.totalorder %s16, 1
      %p86 = por %p84, %p85
      %p87 = scmp.ne.s32.totalorder %s76, %s77
      %p88 = scmp.eq.s32.totalorder %s16, 0
      %p89 = por %p87, %p88
      %p90 = scmp.ne.s32.totalorder %s76, %s77
      %p91 = scmp.eq.s32.totalorder %s17, 1
      %p92 = por %p90, %p91
      %p94 = scmp.ne.s32.totalorder %s77, %s93
      %p95 = scmp.eq.s32.totalorder %s17, 0
      %p96 = por %p94, %p95
      %p97 = scmp.le.s32.totalorder 1, %s11
      %p98 = scmp.lt.s32.totalorder %s11, 3
      %p99 = pnand %p97, %p98
      %p100 = pneg %p99
      // Predicated region
      $region9: #{tpu_custom_call.1} parent=5 // pred_check
        _
      $region10: #{tpu_custom_call.1} parent=5 // pred_check_branch
        %102 = sbr.rel (%p99) target = $region12
      $region11: #{tpu_custom_call.1} parent=5 // pred_region
        %s103 = ssub.s32 %s11, 1
      $region12: #{tpu_custom_call.1} parent=5 // pred_fallthru
        _
      %p104 = scmp.lt.s32.totalorder %s11, 2
      // Predicated region
      $region13: #{tpu_custom_call.1} parent=5 // pred_check
        %p105 = pneg %p104
      $region14: #{tpu_custom_call.1} parent=5 // pred_check_branch
        %107 = sbr.rel (%p105) target = $region16
      $region15: #{tpu_custom_call.1} parent=5 // pred_region
        // Predicated region
        $region17: #{tpu_custom_call.1} parent=15 // pred_check
          %p108 = pneg %p31
        $region18: #{tpu_custom_call.1} parent=15 // pred_check_branch
          %110 = sbr.rel (%p108) target = $region20
        $region19: #{tpu_custom_call.1} parent=15 // pred_region
          %p111 = scmp.lt.s32.totalorder %s11, 1
          %s112 = scalar_select %p111, %s11, 1
          %s113 = smul.addr %s112, 8
          %s114 = scalar_lea.vmem %s0, %s113
        $region20: #{tpu_custom_call.1} parent=15 // pred_fallthru
          _
        // Predicated region
        $region21: #{tpu_custom_call.1} parent=15 // pred_check
          %p115 = pneg %p57
        $region22: #{tpu_custom_call.1} parent=15 // pred_check_branch
          %117 = sbr.rel (%p115) target = $region24
        $region23: #{tpu_custom_call.1} parent=15 // pred_region
          %p118 = scmp.lt.s32.totalorder %s11, 1
          %s119 = scalar_select %p118, %s11, 1
          %s120 = smul.addr %s119, 8
          %s121 = scalar_lea.vmem %s1, %s120
        $region24: #{tpu_custom_call.1} parent=15 // pred_fallthru
          _
      $region16: #{tpu_custom_call.1} parent=5 // pred_fallthru
        _
      %p122 = scmp.le.s32.totalorder 1, %s11
      %p123 = scmp.lt.s32.totalorder %s11, 3
      %p124 = pnand %p122, %p123
      %p125 = pneg %p124
      // Predicated region
      $region25: #{tpu_custom_call.1} parent=5 // pred_check
        _
      $region26: #{tpu_custom_call.1} parent=5 // pred_check_branch
        %127 = sbr.rel (%p124) target = $region28
      $region27: #{tpu_custom_call.1} parent=5 // pred_region
        %s128 = ssub.s32 %s11, 1
        %p129 = scmp.lt.s32.totalorder %s16, 1
        %s130 = scalar_select %p129, %s16, 1
        %s131 = smul.addr %s130, 8
        %s132 = scalar_lea.vmem %s0, %s131
        %p133 = pneg %p37
        %p134 = pneg %p34
        %p135 = scmp.lt.s32.totalorder %s16, 1
        %s136 = scalar_select %p135, %s16, 1
        %s137 = smul.addr %s136, 8
        %s138 = scalar_lea.vmem %s1, %s137
        %p139 = pneg %p63
        %p140 = pneg %p60
        %p141 = pneg %p89
        %p142 = pneg %p86
        %s143 = sand.u32 %s76, 1
        %s144 = scalar_lea.sflag [#allocation3], %s143
        %s145 = sand.u32 %s76, 1
        %s146 = smul.addr %s145, 8
        %s147 = scalar_lea.vmem [#allocation2], %s146
        %p148 = scmp.lt.s32.totalorder %s16, 1
        %s149 = scalar_select %p148, %s16, 1
        %s150 = smul.addr %s149, 8
        %s151 = scalar_lea.vmem %s0, %s150
        %p152 = scmp.lt.s32.totalorder %s16, 1
        %s153 = scalar_select %p152, %s16, 1
        %s154 = smul.addr %s153, 8
        %s155 = scalar_lea.vmem %s1, %s154
        %v156 = vld [vmem:[%s155] sm:$0xff]
        %v157 = vld [vmem:[%s151] sm:$0xff]
        %v158 = vlaneseq
        %v159 = vand.u32 %v158, 127
        %160 = vmax.xlane.f32.xlu0 %v157
        %v161 = vpop.xlane.xlu0 %160
        %vm162 = vcmp.eq.f32.partialorder %v157, %v161
        %v163 = vsel %vm162, %v159, 128
        %v164 = vand.u32 %v163, 65535
        %v165 = vshra.s32 %v163, 16
        %v166 = vcvt.s32.f32 %v164
        %v167 = vcvt.s32.f32 %v165
        %168 = vmin.xlane.f32.xlu0 %v167
        %v169 = vpop.xlane.xlu0 %168
        %vm170 = vcmp.eq.f32.partialorder %v167, %v169
        %v171 = vsel %vm170, %v166, inf
        %172 = vmin.xlane.f32.xlu0 %v171
        %v173 = vpop.xlane.xlu0 %172
        %v174 = vcvt.f32.s32 %v173
        %v175 = vcvt.f32.s32 %v169
        %v176 = vshll.u32 %v175, 16
        %v177 = vadd.s32 %v176, %v174
        %vm178 = vcmp.gt.f32.partialorder %v161, -inf
        %v179 = vsel %vm178, %v177, 128
        %v180 = vsub.f32 -inf, %v161
        %v181 = vmul.f32 %v180, 1.442695
        %v182 = vpow.pop %v181
        %v183 = vmul.f32 %v182, 0.0
        %v184 = vsub.f32 %v157, %v161
        %v185 = vmul.f32 %v184, 1.442695
        %v186 = vpow.pop %v185
        %187 = vadd.xlane.f32.xlu0 %v186
        %v188 = vpop.xlane.xlu0 %187
        %v189 = vadd.f32 %v183, %v188
        %190 = vset.pattern.permute.xlu0 0
        %191 = vperm.xlu0 %190, %v156
        %v192 = vpop.permute.xlu0 %191
        %vm193 = vcmp.eq.s32.totalorder %v159, %v192
        %v194 = vsel %vm193, %v157, 0.0
        %195 = vadd.xlane.f32.xlu0 %v194
        %v196 = vpop.xlane.xlu0 %195
        %v197 = vadd.f32 %v196, 0.0
        %v198 = vlog2.pop %v189
        %v199 = vmul.f32 %v198, 0.6931472
        %v200 = vadd.f32 %v199, %v161
        %vm201 = vcmp.ne.s32.totalorder %v156, 4294967196
        %v202 = vsub.f32 %v200, %v197
        %v203 = vsel %vm201, %v202, 0.0
        %vm204 = vcmp.eq.s32.totalorder %v179, %v156
        %v205 = vsel %vm204, 1, 0
        %v206 = vcvt.s32.f32 %v205
        %vm207 = vcmask 7168
        %v208 = vsel %vm207, %v203, 0.0
        %209 = vadd.xlane.f32.xlu0 %v208
        %v210 = vpop.xlane.xlu0 %209
        %v211 = vrot.slane %v210, 4
        %v212 = vadd.f32 %v210, %v211
        %v213 = vrot.slane %v212, 2
        %v214 = vadd.f32 %v212, %v213
        %v215 = vrot.slane %v214, 1
        %v216 = vadd.f32 %v214, %v215
        %s217 = vtos %v216
        %v218 = vsel %vm201, 1, 0
        %v219 = vcvt.s32.f32 %v218
        %v220 = vsel %vm207, %v219, 0.0
        %221 = vadd.xlane.f32.xlu0 %v220
        %v222 = vpop.xlane.xlu0 %221
        %v223 = vrot.slane %v222, 4
        %v224 = vadd.f32 %v222, %v223
        %v225 = vrot.slane %v224, 2
        %v226 = vadd.f32 %v224, %v225
        %v227 = vrot.slane %v226, 1
        %v228 = vadd.f32 %v226, %v227
        %s229 = vtos %v228
        %v230 = vsel %vm207, %v206, 0.0
        %231 = vadd.xlane.f32.xlu0 %v230
        %v232 = vpop.xlane.xlu0 %231
        %v233 = vrot.slane %v232, 4
        %v234 = vadd.f32 %v232, %v233
        %v235 = vrot.slane %v234, 2
        %v236 = vadd.f32 %v234, %v235
        %v237 = vrot.slane %v236, 1
        %v238 = vadd.f32 %v236, %v237
        %s239 = vtos %v238
        %v240 = vlaneseq
        %v241 = vshrl.u32 %v240, 7
        %vm242 = vcmp.eq.s32.totalorder %v241, 0
        %vm243 = vcmp.eq.s32.totalorder %v159, 0
        %vm244 = vmand %vm242, %vm243
        %v245 = vstv %s217
        %v246 = vsel %vm244, %v245, 0.0
        %vm247 = vcmp.eq.s32.totalorder %v159, 1
        %vm248 = vmand %vm242, %vm247
        %v249 = vstv %s229
        %v250 = vsel %vm248, %v249, 0.0
        %v251 = vadd.f32 %v246, %v250
        %vm252 = vcmp.eq.s32.totalorder %v159, 2
        %vm253 = vmand %vm242, %vm252
        %v254 = vstv %s239
        %v255 = vsel %vm253, %v254, 0.0
        %v256 = vadd.f32 %v251, %v255
        %257 = vst [vmem:[%s147] sm:$0xff] %v256
        %s258 = sand.u32 %s76, 1
        %s259 = scalar_lea.sflag [#allocation3], %s258
        %s260 = sand.u32 %s76, 1
        %s261 = smul.addr %s260, 8
        %s262 = scalar_lea.vmem [#allocation2], %s261
        // Predicated region
        $region29: #{tpu_custom_call.1} parent=27 // pred_check
          %p263 = pneg %p86
        $region30: #{tpu_custom_call.1} parent=27 // pred_check_branch
          %265 = sbr.rel (%p263) target = $region32
        $region31: #{tpu_custom_call.1} parent=27 // pred_region
          %s267 = ssub.s32 128, 128
          %268 = vsyncadd %s259, %s267
          %s269 = smul.addr %s16, 128
          %s270 = scalar_lea.hbm %s2, %s269
          %s272 = sshll.u32 %s262, 4
          %s273 = int_to_ptr.vmem [resolvable:$true] %s272
          %275 = dma.vmem_to_hbm [thread:$0]  %s273, 128, %s270, %s259
        $region32: #{tpu_custom_call.1} parent=27 // pred_fallthru
          _
      $region28: #{tpu_custom_call.1} parent=5 // pred_fallthru
        _
      %p276 = scmp.le.s32.totalorder 2, %s11
      // Predicated region
      $region33: #{tpu_custom_call.1} parent=5 // pred_check
        %p277 = pneg %p276
      $region34: #{tpu_custom_call.1} parent=5 // pred_check_branch
        %279 = sbr.rel (%p277) target = $region36
      $region35: #{tpu_custom_call.1} parent=5 // pred_region
        %s280 = ssub.s32 %s11, 2
        // Predicated region
        $region37: #{tpu_custom_call.1} parent=35 // pred_check
          %p281 = pneg %p92
        $region38: #{tpu_custom_call.1} parent=35 // pred_check_branch
          %283 = sbr.rel (%p281) target = $region40
        $region39: #{tpu_custom_call.1} parent=35 // pred_region
          %s284 = sand.u32 %s77, 1
          %s285 = scalar_lea.sflag [#allocation3], %s284
          %s286 = sand.u32 %s77, 1
          %s287 = smul.addr %s286, 8
          %s288 = scalar_lea.vmem [#allocation2], %s287
          %289 = dma.done %s285, 128
        $region40: #{tpu_custom_call.1} parent=35 // pred_fallthru
          _
      $region36: #{tpu_custom_call.1} parent=5 // pred_fallthru
        _
    $region6: #{tpu_custom_call.1} parent=1 // loop_footer
      %s15 = sadd.s32 1, %s11
    $region7: #{tpu_custom_call.1} parent=1 // loop_footer_branch
      %10 = sbr.rel target = $region3
    $region8: #{tpu_custom_call.1} parent=1 // loop_exit
      _
    %290 = vsyncpa [#allocation3], 1
    %s291 = scalar_lea.sflag [#allocation3], 1
    %292 = vsyncpa %s291, 1

</llo_original>
